<compile_context>
chip_gen: v6e
topology: v6e:2x2x1
jax: 0.10.0
libtpu: 0.0.40
codegen_flags: <defaults>
</compile_context>

<pallas_src>
import math
from functools import partial

import jax
import jax.numpy as jnp
from jax import lax
from jax.experimental import pallas as pl
from jax.experimental.pallas import tpu as pltpu


# ----------------------------------------------------------------------------
# Hardware / tile-size helpers
# ----------------------------------------------------------------------------
def _vmem_capacity_bytes():
    """Per-core VMEM capacity; conservative 64 MiB fallback (v7x per-TC)."""
    try:
        info = pltpu.get_tpu_info()
        cap = getattr(info, "vmem_capacity_bytes", None)
        if cap:
            return int(cap)
    except Exception:
        pass
    return 64 << 20


def _round_up(n, m):
    return ((n + m - 1) // m) * m


def _choose_tile(dim, target):
    """Largest tile <= target dividing `dim`; prefer multiples of 128
    (lane-dense), then multiples of 8, else the full dimension."""
    if dim <= target:
        return dim
    for step in (128, 8):
        t = (target // step) * step
        while t >= step:
            if dim % t == 0:
                return t
            t -= step
    return dim


def _pick_seq_tiles(S, P, out_bpe, qk_bpe, ti_target, tj_target, budget):
    """Pick (TI, TJ) so the double-buffered blocks fit `budget`.
    TJ (lane / MXU-N axis) is kept at 128 when possible; TI shrinks first."""
    ti = _choose_tile(S, ti_target)
    tj = _choose_tile(S, tj_target)

    def footprint(ti_, tj_):
        out_blk = ti_ * tj_ * P * out_bpe
        q_blk = ti_ * P * qk_bpe
        kv_blk = tj_ * P * (qk_bpe + 4)          # k (compute dtype) + v (f32)
        return 2 * (out_blk + q_blk + kv_blk)    # double-buffered

    for _ in range(32):
        if footprint(ti, tj) <= budget:
            break
        nti = _choose_tile(S, max(8, ti // 2))   # shrink TI first
        if nti < ti:
            ti = nti
            continue
        ntj = _choose_tile(S, max(8, tj // 2))   # only then shrink TJ
        if ntj < tj:
            tj = ntj
            continue
        break
    return ti, tj, footprint(ti, tj)


# ----------------------------------------------------------------------------
# Kernel A: fused QKV projection (batch folded into M, 3 weights concatenated)
# ----------------------------------------------------------------------------
def _qkv_proj_kernel(x_ref, w_ref, b_ref, q_ref, k_ref, v_ref):
    # x_ref: (TM, Dx)  w_ref: (Dx, 3P)  b_ref: (1, 3P)
    # q_ref/k_ref: (TM, P) compute dtype   v_ref: (TM, P) f32
    p = q_ref.shape[-1]
    acc = jnp.dot(x_ref[...], w_ref[...], preferred_element_type=jnp.float32)
    acc = acc + b_ref[...]
    q_ref[...] = acc[:, :p].astype(q_ref.dtype)
    k_ref[...] = acc[:, p:2 * p].astype(k_ref.dtype)
    v_ref[...] = acc[:, 2 * p:].astype(v_ref.dtype)


# ----------------------------------------------------------------------------
# Kernel B: tiled causal outer-product attention
# ----------------------------------------------------------------------------
def _attn_tile_kernel(q_ref, k_ref, v_ref, o_ref, *, ti, tj, attention_fn):
    # q_ref: (1, TI, P)   k_ref/v_ref: (1, TJ, P)   o_ref: (1, TI, TJ, P)
    i0 = pl.program_id(1) * ti
    j0 = pl.program_id(2) * tj

    # Tile lies strictly above the diagonal -> every (i, j) in it has j > i.
    above_diag = j0 > i0 + (ti - 1)

    @pl.when(above_diag)
    def _zero_tile():
        o_ref[...] = jnp.zeros_like(o_ref)

    @pl.when(jnp.logical_not(above_diag))
    def _compute_tile():
        q = q_ref[0]  # (TI, P), 1/sqrt(P) scale already folded into Wq/bq
        k = k_ref[0]  # (TJ, P)
        v = v_ref[0]  # (TJ, P) f32

        # logits = q @ k^T without materializing a transpose; f32 accumulate.
        logits = lax.dot_general(
            q, k, (((1,), (1,)), ((), ())), preferred_element_type=jnp.float32
        )  # (TI, TJ)

        if attention_fn == "sigmoid":
            scores = jax.nn.sigmoid(logits)
        elif attention_fn == "relu":
            scores = jnp.maximum(logits, 0.0)
        elif attention_fn == "linear":
            scores = logits
        else:
            raise ValueError(f"Attention function {attention_fn} not supported.")

        # Only tiles the diagonal actually crosses pay for the iota/cmp/select.
        crosses_diag = (j0 + (tj - 1)) > i0

        # TODO(synk): scores[:, :, None] * v implies a lanes->sublanes relayout
        # of the (TI,TJ) scores tile; revisit with a transposed-logits layout if
        # the bundle dump shows exposed XLU time now that the store is bf16.
        @pl.when(crosses_diag)
        def _masked_store():
            row = i0 + lax.broadcasted_iota(jnp.int32, (ti, tj), 0)
            col = j0 + lax.broadcasted_iota(jnp.int32, (ti, tj), 1)
            s = jnp.where(col <= row, scores, 0.0)
            o_ref[0] = (s[:, :, None] * v[None, :, :]).astype(o_ref.dtype)

        @pl.when(jnp.logical_not(crosses_diag))
        def _unmasked_store():
            o_ref[0] = (scores[:, :, None] * v[None, :, :]).astype(o_ref.dtype)


# ----------------------------------------------------------------------------
# Wrapper
# ----------------------------------------------------------------------------
def attention_forward(x_set, params, *, attention_fn="sigmoid",
                      out_dtype=jnp.bfloat16, compute_dtype=jnp.bfloat16,
                      ti_target=256, tj_target=128):
    """x_set: (B, S, x_dim).  Returns (B, S, S, phi_dim) in `out_dtype`."""
    B, S, Dx = x_set.shape
    wq, bq, wk, bk, wv, bv = params
    P = wq.shape[1]

    out_bpe = jnp.dtype(out_dtype).itemsize
    qk_bpe = jnp.dtype(compute_dtype).itemsize

    cap = _vmem_capacity_bytes()
    budget = int(cap * 0.55)

    # Pad S minimally (sublane alignment); only pad to 128 if tiles otherwise
    # cannot fit the budget (awkward S with no usable divisors).
    S_pad = _round_up(S, 8)
    TI, TJ, fp = _pick_seq_tiles(S_pad, P, out_bpe, qk_bpe,
                                 ti_target, tj_target, budget)
    if fp > budget and S_pad % 128 != 0:
        S_pad = _round_up(S, 128)
        TI, TJ, fp = _pick_seq_tiles(S_pad, P, out_bpe, qk_bpe,
                                     ti_target, tj_target, budget)

    x_in = x_set
    if S_pad != S:
        x_in = jnp.pad(x_set, ((0, 0), (0, S_pad - S), (0, 0)))

    # Fold the 1/sqrt(phi_dim) scale into the Q projection; fuse the weights.
    scale = 1.0 / math.sqrt(float(P))
    w_qkv = jnp.concatenate([wq * scale, wk, wv], axis=1).astype(compute_dtype)
    b_qkv = jnp.concatenate([bq * scale, bk, bv], axis=1).astype(jnp.float32)

    # ---- Kernel A: fused QKV projection over all B*S rows ------------------
    BS = B * S_pad
    x2d = x_in.reshape(BS, Dx).astype(compute_dtype)
    TM = _choose_tile(BS, 256)

    q, k, v = pl.pallas_call(
        _qkv_proj_kernel,
        out_shape=(jax.ShapeDtypeStruct((BS, P), compute_dtype),
                   jax.ShapeDtypeStruct((BS, P), compute_dtype),
                   jax.ShapeDtypeStruct((BS, P), jnp.float32)),
        grid_spec=pltpu.PrefetchScalarGridSpec(
            num_scalar_prefetch=0,
            grid=(BS // TM,),
            in_specs=[
                pl.BlockSpec((TM, Dx), lambda m: (m, 0)),
                pl.BlockSpec((Dx, 3 * P), lambda m: (0, 0)),
                pl.BlockSpec((1, 3 * P), lambda m: (0, 0)),
            ],
            out_specs=[
                pl.BlockSpec((TM, P), lambda m: (m, 0)),
                pl.BlockSpec((TM, P), lambda m: (m, 0)),
                pl.BlockSpec((TM, P), lambda m: (m, 0)),
            ],
        ),
        compiler_params=pltpu.CompilerParams(
            dimension_semantics=("parallel",)),
    )(x2d, w_qkv, b_qkv)

    # Free reshapes (leading-dim split only).
    q = q.reshape(B, S_pad, P)
    k = k.reshape(B, S_pad, P)
    v = v.reshape(B, S_pad, P)

    # ---- Kernel B: tiled (B, I, J) causal outer product ---------------------
    nI, nJ = S_pad // TI, S_pad // TJ
    kernel = partial(_attn_tile_kernel, ti=TI, tj=TJ, attention_fn=attention_fn)

    # Clamp j so above-diagonal grid steps re-use an already-fetched K/V block
    # (their content is never read; the pipeline elides the redundant DMA).
    def _kv_index(b, i, j):
        last_j = (i * TI + (TI - 1)) // TJ
        return (b, jnp.minimum(j, last_j), 0)

    vmem_est = fp + (2 << 20)
    vmem_limit = int(min(max(vmem_est * 5 // 4, 24 << 20),
                         max(int(cap * 0.78), vmem_est + (2 << 20))))

    out = pl.pallas_call(
        kernel,
        out_shape=jax.ShapeDtypeStruct((B, S_pad, S_pad, P), out_dtype),
        grid_spec=pltpu.PrefetchScalarGridSpec(
            num_scalar_prefetch=0,
            grid=(B, nI, nJ),
            in_specs=[
                pl.BlockSpec((1, TI, P), lambda b, i, j: (b, i, 0)),  # Q (i-tile)
                pl.BlockSpec((1, TJ, P), _kv_index),                  # K (j-tile)
                pl.BlockSpec((1, TJ, P), _kv_index),                  # V (j-tile)
            ],
            out_specs=pl.BlockSpec((1, TI, TJ, P),
                                   lambda b, i, j: (b, i, j, 0)),
        ),
        compiler_params=pltpu.CompilerParams(
            dimension_semantics=("parallel", "parallel", "parallel"),
            vmem_limit_bytes=vmem_limit),
    )(q, k, v)

    if S_pad != S:
        out = out[:, :S, :S, :]
    return out


# ----------------------------------------------------------------------------
# Reference + init (for the self-check)
# ----------------------------------------------------------------------------
def init_params(key, x_dim, phi_dim):
    """nn.Linear-style init (uniform(-1/sqrt(x_dim), 1/sqrt(x_dim)))."""
    ks = jax.random.split(key, 6)
    bound = 1.0 / math.sqrt(x_dim)
    u = lambda k, shape: jax.random.uniform(k, shape, jnp.float32, -bound, bound)
    wq, wk, wv = (u(ks[0], (x_dim, phi_dim)), u(ks[1], (x_dim, phi_dim)),
                  u(ks[2], (x_dim, phi_dim)))
    bq, bk, bv = (u(ks[3], (1, phi_dim)), u(ks[4], (1, phi_dim)),
                  u(ks[5], (1, phi_dim)))
    return wq, bq, wk, bk, wv, bv


def attention_reference(x_set, params, *, attention_fn="sigmoid"):
    """Pure-JAX reference mirroring the PyTorch forward."""
    wq, bq, wk, bk, wv, bv = params
    q = x_set @ wq + bq
    k = x_set @ wk + bk
    v = x_set @ wv + bv
    logits = jnp.einsum("bid,bjd->bij", q, k) / math.sqrt(float(wq.shape[1]))
    if attention_fn == "sigmoid":
        scores = jax.nn.sigmoid(logits)
    elif attention_fn == "relu":
        scores = jnp.maximum(logits, 0.0)
    else:
        scores = logits
    S = x_set.shape[1]
    mask = jnp.tril(jnp.ones((S, S), jnp.float32))
    return (scores * mask)[..., None] * v[:, None, :, :]


if __name__ == "__main__":
    key = jax.random.PRNGKey(0)

    # Case 1: module-sized toy shapes, single tile per batch element.
    # Exact mode (f32 compute + f32 output) for a tight numerics check.
    B, S, x_dim, phi_dim = 2, 8, 16, 32
    kx, kp = jax.random.split(key)
    x_set = jax.random.normal(kx, (B, S, x_dim), dtype=jnp.float32)
    params = init_params(kp, x_dim, phi_dim)

    ok = True
    for fn in ("sigmoid", "relu", "linear"):
        out = jax.block_until_ready(attention_forward(
            x_set, params, attention_fn=fn,
            compute_dtype=jnp.float32, out_dtype=jnp.float32))
        ref = attention_reference(x_set, params, attention_fn=fn)
        ok = ok and (out.shape == (B, S, S, phi_dim))
        ok = ok and bool(jnp.allclose(out, ref, atol=1e-4, rtol=1e-4))

    # Case 2: force multiple sequence tiles so the above-diagonal skip, the
    # diagonal-crossing mask gating and the clamped K/V index_maps are hit.
    B2, S2 = 2, 16
    kx2, kp2 = jax.random.split(kp)
    x_set2 = jax.random.normal(kx2, (B2, S2, x_dim), dtype=jnp.float32)
    params2 = init_params(kp2, x_dim, phi_dim)
    out2 = jax.block_until_ready(attention_forward(
        x_set2, params2, attention_fn="sigmoid",
        compute_dtype=jnp.float32, out_dtype=jnp.float32,
        ti_target=8, tj_target=8))
    ref2 = attention_reference(x_set2, params2, attention_fn="sigmoid")
    ok = ok and (out2.shape == (B2, S2, S2, phi_dim))
    ok = ok and bool(jnp.allclose(out2, ref2, atol=1e-4, rtol=1e-4))

    # Case 3: default performance path (bf16 MXU inputs + bf16 output).
    out3 = jax.block_until_ready(attention_forward(
        x_set2, params2, attention_fn="sigmoid", ti_target=8, tj_target=8))
    ok = ok and (out3.shape == (B2, S2, S2, phi_dim))
    ok = ok and (out3.dtype == jnp.bfloat16)
    ok = ok and bool(jnp.allclose(out3.astype(jnp.float32), ref2,
                                  atol=5e-2, rtol=5e-2))

    assert ok, "mismatch vs reference"
    print("KERNEL_OK")
</pallas_src>

<mosaic_0001>
module attributes {stable_mosaic.version = 11 : i64} {
  func.func @_qkv_proj_kernel(%arg0: i32, %arg1: memref<16x16xf32, #tpu.memory_space<vmem>>, %arg2: memref<16x96xf32, #tpu.memory_space<vmem>>, %arg3: memref<1x96xf32, #tpu.memory_space<vmem>>, %arg4: memref<16x32xf32, #tpu.memory_space<vmem>>, %arg5: memref<16x32xf32, #tpu.memory_space<vmem>>, %arg6: memref<16x32xf32, #tpu.memory_space<vmem>>) attributes {dimension_semantics = [#tpu.dimension_semantics<parallel>], iteration_bounds = array<i64: 1>, scalar_prefetch = 0 : i64, scratch_operands = 0 : i64, tpu.core_type = #tpu.core_type<tc>, window_params = [{transform_indices = @transform_0, window_bounds = array<i64: 16, 16>}, {pipeline_mode = #tpu.pipeline_mode<synchronous>, transform_indices = @transform_1, window_bounds = array<i64: 16, 96>}, {pipeline_mode = #tpu.pipeline_mode<synchronous>, transform_indices = @transform_2, window_bounds = array<i64: 1, 96>}, {transform_indices = @transform_3, window_bounds = array<i64: 16, 32>}, {transform_indices = @transform_4, window_bounds = array<i64: 16, 32>}, {transform_indices = @transform_5, window_bounds = array<i64: 16, 32>}]} {
    %c0 = arith.constant 0 : index
    %c0_0 = arith.constant 0 : index
    %0 = vector.load %arg1[%c0, %c0_0] : memref<16x16xf32, #tpu.memory_space<vmem>>, vector<16x16xf32>
    %c0_1 = arith.constant 0 : index
    %c0_2 = arith.constant 0 : index
    %1 = vector.load %arg2[%c0_1, %c0_2] : memref<16x96xf32, #tpu.memory_space<vmem>>, vector<16x96xf32>
    %cst = arith.constant dense<0.000000e+00> : vector<16x96xf32>
    %2 = tpu.matmul %0, %1, %cst {dimension_numbers = #tpu.dot_dimension_numbers<[1], [0], [0], [1], [0, 0, 1, 1], [], []>} : vector<16x16xf32>, vector<16x96xf32>, vector<16x96xf32> -> vector<16x96xf32>
    %c0_3 = arith.constant 0 : index
    %c0_4 = arith.constant 0 : index
    %3 = vector.load %arg3[%c0_3, %c0_4] : memref<1x96xf32, #tpu.memory_space<vmem>>, vector<1x96xf32>
    %4 = vector.broadcast %3 : vector<1x96xf32> to vector<16x96xf32>
    %5 = arith.addf %2, %4 : vector<16x96xf32>
    %6 = vector.extract_strided_slice %5 {offsets = [0, 0], sizes = [16, 32], strides = [1, 1]} : vector<16x96xf32> to vector<16x32xf32>
    %c0_5 = arith.constant 0 : index
    %c0_6 = arith.constant 0 : index
    %7 = vector.load %arg4[%c0_5, %c0_6] : memref<16x32xf32, #tpu.memory_space<vmem>>, vector<16x32xf32>
    tpu.vector_store %arg4[%c0_5, %c0_6], %6 {strides = array<i32>} : memref<16x32xf32, #tpu.memory_space<vmem>>, vector<16x32xf32>,
    %8 = vector.extract_strided_slice %5 {offsets = [0, 32], sizes = [16, 32], strides = [1, 1]} : vector<16x96xf32> to vector<16x32xf32>
    %c0_7 = arith.constant 0 : index
    %c0_8 = arith.constant 0 : index
    %9 = vector.load %arg5[%c0_7, %c0_8] : memref<16x32xf32, #tpu.memory_space<vmem>>, vector<16x32xf32>
    tpu.vector_store %arg5[%c0_7, %c0_8], %8 {strides = array<i32>} : memref<16x32xf32, #tpu.memory_space<vmem>>, vector<16x32xf32>,
    %10 = vector.extract_strided_slice %5 {offsets = [0, 64], sizes = [16, 32], strides = [1, 1]} : vector<16x96xf32> to vector<16x32xf32>
    %c0_9 = arith.constant 0 : index
    %c0_10 = arith.constant 0 : index
    %11 = vector.load %arg6[%c0_9, %c0_10] : memref<16x32xf32, #tpu.memory_space<vmem>>, vector<16x32xf32>
    tpu.vector_store %arg6[%c0_9, %c0_10], %10 {strides = array<i32>} : memref<16x32xf32, #tpu.memory_space<vmem>>, vector<16x32xf32>,
    return
  }
  func.func @transform_0(%arg0: i32) -> (i32, i32) {
    %c0_i32 = arith.constant 0 : i32
    %c0_i32_0 = arith.constant 0 : i32
    return %arg0, %c0_i32 : i32, i32
  }
  func.func @transform_1(%arg0: i32) -> (i32, i32) {
    %c0_i32 = arith.constant 0 : i32
    %c0_i32_0 = arith.constant 0 : i32
    %c0_i32_1 = arith.constant 0 : i32
    return %c0_i32, %c0_i32_0 : i32, i32
  }
  func.func @transform_2(%arg0: i32) -> (i32, i32) {
    %c0_i32 = arith.constant 0 : i32
    %c0_i32_0 = arith.constant 0 : i32
    %c0_i32_1 = arith.constant 0 : i32
    return %c0_i32, %c0_i32_0 : i32, i32
  }
  func.func @transform_3(%arg0: i32) -> (i32, i32) {
    %c0_i32 = arith.constant 0 : i32
    %c0_i32_0 = arith.constant 0 : i32
    return %arg0, %c0_i32 : i32, i32
  }
  func.func @transform_4(%arg0: i32) -> (i32, i32) {
    %c0_i32 = arith.constant 0 : i32
    %c0_i32_0 = arith.constant 0 : i32
    return %arg0, %c0_i32 : i32, i32
  }
  func.func @transform_5(%arg0: i32) -> (i32, i32) {
    %c0_i32 = arith.constant 0 : i32
    %c0_i32_0 = arith.constant 0 : i32
    return %arg0, %c0_i32 : i32, i32
  }
}

</mosaic_0001>

<llo_original>
// kernel: tpu_custom_call.1
$region0: #{tpu_custom_call.1}
  #allocation0 [shape = 'u32[]', space=smem, size = 0x4, offset = 0x4, fixed_abs, tag = 'smem constant byte address 0x4 - core index']
  #allocation1 [shape = 'u32[144,128]{1,0:T(1,128)}', space=vmem, size = 0x12000, scoped, tag = 'internal scratch']
  %s0 = inlined_call_operand.hbm [shape: f32[16,16], index: 0, kind: input, shape index: {}]
  %s1 = inlined_call_operand.hbm [shape: f32[16,96], index: 1, kind: input, shape index: {}]
  %s2 = inlined_call_operand.vmem [shape: f32[1,96], index: 2, kind: input, shape index: {}]
  %s3 = inlined_call_operand.hbm [shape: f32[16,32], index: 3, kind: output, shape index: {0}]
  %s4 = inlined_call_operand.hbm [shape: f32[16,32], index: 4, kind: output, shape index: {1}]
  %s5 = inlined_call_operand.hbm [shape: f32[16,32], index: 5, kind: output, shape index: {2}]
  %6 = xla_tuple %s3, %s4, %s5
  %s7 = sld [smem:[#allocation0]]
  $region46: #{tpu_custom_call.1} parent=0
    _
  %s9 = ssub.s32 1, %s7
  %s10 = scalar_select 0, %s9, %s7
  $region1: #{tpu_custom_call.1} parent=0
    #allocation2 [shape = 'u8[8192]{0}', space=vmem, size = 0x2000, scoped, tag = 'input window, operand 0, single buffered']
    #allocation3 [shape = 's32[1]{0}', space=sflag, size = 0x4, scoped, tag = 'scoped memory for tpu_custom_call.1']
    #allocation4 [shape = 's32[1]{0}', space=sflag, size = 0x4, scoped, tag = 'scoped memory for tpu_custom_call.1']
    #allocation5 [shape = 'u8[8192]{0}', space=vmem, size = 0x2000, scoped, tag = 'input window, operand 1, single buffered']
    #allocation6 [shape = 's32[1]{0}', space=sflag, size = 0x4, scoped, tag = 'scoped memory for tpu_custom_call.1']
    #allocation7 [shape = 'u8[8192]{0}', space=vmem, size = 0x2000, scoped, tag = 'output window, operand 0, single buffered']
    #allocation8 [shape = 'u8[8192]{0}', space=vmem, size = 0x2000, scoped, tag = 'output window, operand 1, single buffered']
    #allocation9 [shape = 's32[1]{0}', space=sflag, size = 0x4, scoped, tag = 'scoped memory for tpu_custom_call.1']
    #allocation10 [shape = 'u8[8192]{0}', space=vmem, size = 0x2000, scoped, tag = 'output window, operand 2, single buffered']
    %11 = vsyncpa [#allocation3], 0
    %12 = vsyncpa [#allocation6], 0
    %13 = vsyncpa [#allocation4], 0
    %14 = vsyncpa [#allocation9], 0
    // Predicated region
    $region2: #{tpu_custom_call.1} parent=1 // pred_check
      _
    $region3: #{tpu_custom_call.1} parent=1 // pred_check_branch
      %16 = sbr.rel (0) target = $region5
    $region4: #{tpu_custom_call.1} parent=1 // pred_region
      %s18 = ssub.s32 256, 256
      %19 = vsyncadd [#allocation3], %s18
      %s20 = sshll.u32 [#allocation2], 4
      %s21 = int_to_ptr.vmem [resolvable:$true] %s20
      %26 = dma.hbm_to_vmem [thread:$0]  %s0, 256, %s21, [#allocation3], 128, 128, 8
    $region5: #{tpu_custom_call.1} parent=1 // pred_fallthru
      _
    // Predicated region
    $region6: #{tpu_custom_call.1} parent=1 // pred_check
      _
    $region7: #{tpu_custom_call.1} parent=1 // pred_check_branch
      %28 = sbr.rel (0) target = $region9
    $region8: #{tpu_custom_call.1} parent=1 // pred_region
      %s30 = ssub.s32 256, 256
      %31 = vsyncadd [#allocation6], %s30
      %s32 = sshll.u32 [#allocation5], 4
      %s33 = int_to_ptr.vmem [resolvable:$true] %s32
      %38 = dma.hbm_to_vmem [thread:$0]  %s1, 256, %s33, [#allocation6], 128, 128, 8
    $region9: #{tpu_custom_call.1} parent=1 // pred_fallthru
      _
    // Predicated region
    $region10: #{tpu_custom_call.1} parent=1 // pred_check
      _
    $region11: #{tpu_custom_call.1} parent=1 // pred_check_branch
      %40 = sbr.rel (0) target = $region13
    $region12: #{tpu_custom_call.1} parent=1 // pred_region
      _
    $region13: #{tpu_custom_call.1} parent=1 // pred_fallthru
      _
    // Predicated region
    $region14: #{tpu_custom_call.1} parent=1 // pred_check
      _
    $region15: #{tpu_custom_call.1} parent=1 // pred_check_branch
      %42 = sbr.rel (0) target = $region17
    $region16: #{tpu_custom_call.1} parent=1 // pred_region
      %43 = dma.done [#allocation3], 256
    $region17: #{tpu_custom_call.1} parent=1 // pred_fallthru
      _
    // Predicated region
    $region18: #{tpu_custom_call.1} parent=1 // pred_check
      _
    $region19: #{tpu_custom_call.1} parent=1 // pred_check_branch
      %45 = sbr.rel (0) target = $region21
    $region20: #{tpu_custom_call.1} parent=1 // pred_region
      %46 = dma.done [#allocation6], 256
    $region21: #{tpu_custom_call.1} parent=1 // pred_fallthru
      _
    %v47 = vld [vmem:[#allocation2] sm:$0xff]
    %v48 = vld [vmem:[#allocation2 + $0x8] sm:$0xff]
    %v49 = vld [vmem:[#allocation5] sm:$0xff]
    %v50 = vld [vmem:[#allocation5 + $0x8] sm:$0xff]
    %v51 = vld [vmem:[%s2] sm:$0x1]
    %v53 = vlaneseq
    %v54 = vshrl.u32 %v53, 7
    %v55 = vsub.s32 0, %v54
    %v56 = vrot.slane %v51, %v55
    %vm58 = vcmask 130048
    %v60 = vsel %vm58, %v47, 0
    %v63 = vsel %vm58, %v48, 0
    %65 = vmatprep.subr.mxu0 0.0
    %66 = vmatpush1.msra.mxu0 0.0
    %67 = vmatprep.subr.mxu0 0.0
    %68 = vmatpush1.msra.mxu0 0.0
    %69 = vmatprep.subr.mxu0 0.0
    %70 = vmatpush1.msra.mxu0 0.0
    %71 = vmatprep.subr.mxu0 0.0
    %72 = vmatpush1.msra.mxu0 0.0
    %73 = vmatprep.subr.mxu0 0.0
    %74 = vmatpush1.msra.mxu0 0.0
    %75 = vmatprep.subr.mxu0 0.0
    %76 = vmatpush1.msra.mxu0 0.0
    %77 = vmatprep.subr.mxu0 0.0
    %78 = vmatpush1.msra.mxu0 0.0
    %79 = vmatprep.subr.mxu0 0.0
    %80 = vmatpush1.msra.mxu0 0.0
    %81 = vmatprep.subr.mxu0 0.0
    %82 = vmatpush1.msra.mxu0 0.0
    %83 = vmatprep.subr.mxu0 0.0
    %84 = vmatpush1.msra.mxu0 0.0
    %85 = vmatprep.subr.mxu0 0.0
    %86 = vmatpush1.msra.mxu0 0.0
    %87 = vmatprep.subr.mxu0 0.0
    %88 = vmatpush1.msra.mxu0 0.0
    %89 = vmatprep.subr.mxu0 0.0
    %90 = vmatpush1.msra.mxu0 0.0
    %91 = vmatprep.subr.mxu0 0.0
    %92 = vmatpush1.msra.mxu0 0.0
    %93 = vmatprep.subr.mxu0 0.0
    %94 = vmatpush1.msra.mxu0 %v50
    %95 = vmatprep.subr.mxu0 0.0
    %96 = vmatpush1.msra.mxu0 %v49
    %97 = vmatprep.subr.mxu0 0.0
    %98 = vmatpush2.msra.mxu0 0.0
    %99 = vmatprep.subr.mxu0 0.0
    %100 = vmatpush2.msra.mxu0 0.0
    %101 = vmatprep.subr.mxu0 0.0
    %102 = vmatpush2.msra.mxu0 0.0
    %103 = vmatprep.subr.mxu0 0.0
    %104 = vmatpush2.msra.mxu0 0.0
    %105 = vmatprep.subr.mxu0 0.0
    %106 = vmatpush2.msra.mxu0 0.0
    %107 = vmatprep.subr.mxu0 0.0
    %108 = vmatpush2.msra.mxu0 0.0
    %109 = vmatprep.subr.mxu0 0.0
    %110 = vmatpush2.msra.mxu0 0.0
    %111 = vmatprep.subr.mxu0 0.0
    %112 = vmatpush2.msra.mxu0 0.0
    %113 = vmatprep.subr.mxu0 0.0
    %114 = vmatpush2.msra.mxu0 0.0
    %115 = vmatprep.subr.mxu0 0.0
    %116 = vmatpush2.msra.mxu0 0.0
    %117 = vmatprep.subr.mxu0 0.0
    %118 = vmatpush2.msra.mxu0 0.0
    %119 = vmatprep.subr.mxu0 0.0
    %120 = vmatpush2.msra.mxu0 0.0
    %121 = vmatprep.subr.mxu0 0.0
    %122 = vmatpush2.msra.mxu0 0.0
    %123 = vmatprep.subr.mxu0 0.0
    %124 = vmatpush2.msra.mxu0 0.0
    %125 = vmatprep.subr.mxu0 0.0
    %126 = vmatpush2.msra.mxu0 0.0
    %127 = vmatprep.subr.mxu0 0.0
    %128 = vmatpush2.msra.mxu0 0.0
    %129 = vmatprep.mubr.f32.mxu0 0.0
    %130 = vmatmul.mubr.f32.gmra.mxu0 %v60
    %v131 = vpop.f32.mrf.mxu0
    %v132 = vadd.f32 %v56, %v131
    %v133 = vpop.f32.mrf.mxu0
    %134 = vmatprep.mubr.f32.mxu0 0.0
    %135 = vmatmul.mubr.f32.gmra.mxu0 %v63
    %v136 = vpop.f32.mrf.mxu0
    %v137 = vadd.f32 %v56, %v136
    %v138 = vpop.f32.mrf.mxu0
    %139 = vdwg.mxu0
    %vm140 = vcmask 261120
    %141 = vst.msk [vmem:[#allocation7] sm:$0xff] %vm140, %v132
    %142 = vst.msk [vmem:[#allocation7 + $0x8] sm:$0xff] %vm140, %v137
    %145 = vrot.lane.b32.xlu0 %v132, 96
    %v146 = vpop.permute.xlu0 %145
    %147 = vrot.lane.b32.xlu0 %v137, 96
    %v148 = vpop.permute.xlu0 %147
    %151 = vst.msk [vmem:[#allocation8] sm:$0xff] %vm140, %v146
    %152 = vst.msk [vmem:[#allocation8 + $0x8] sm:$0xff] %vm140, %v148
    %153 = vrot.lane.b32.xlu0 %v132, 64
    %v154 = vpop.permute.xlu0 %153
    %155 = vrot.lane.b32.xlu0 %v137, 64
    %v156 = vpop.permute.xlu0 %155
    %159 = vst.msk [vmem:[#allocation10] sm:$0xff] %vm140, %v154
    %160 = vst.msk [vmem:[#allocation10 + $0x8] sm:$0xff] %vm140, %v156
    // Predicated region
    $region22: #{tpu_custom_call.1} parent=1 // pred_check
      _
    $region23: #{tpu_custom_call.1} parent=1 // pred_check_branch
      %162 = sbr.rel (0) target = $region25
    $region24: #{tpu_custom_call.1} parent=1 // pred_region
      %s164 = ssub.s32 256, 256
      %165 = vsyncadd [#allocation4], %s164
      %s166 = sshll.u32 [#allocation7], 4
      %s167 = int_to_ptr.vmem [resolvable:$true] %s166
      %172 = dma.vmem_to_hbm [thread:$0]  %s167, 256, %s3, [#allocation4], 128, 128, 8
    $region25: #{tpu_custom_call.1} parent=1 // pred_fallthru
      _
    // Predicated region
    $region26: #{tpu_custom_call.1} parent=1 // pred_check
      _
    $region27: #{tpu_custom_call.1} parent=1 // pred_check_branch
      %174 = sbr.rel (0) target = $region29
    $region28: #{tpu_custom_call.1} parent=1 // pred_region
      %s176 = ssub.s32 256, 256
      %177 = vsyncadd [#allocation9], %s176
      %s178 = sshll.u32 [#allocation8], 4
      %s179 = int_to_ptr.vmem [resolvable:$true] %s178
      %184 = dma.vmem_to_hbm [thread:$0]  %s179, 256, %s4, [#allocation9], 128, 128, 8
    $region29: #{tpu_custom_call.1} parent=1 // pred_fallthru
      _
    // Predicated region
    $region30: #{tpu_custom_call.1} parent=1 // pred_check
      _
    $region31: #{tpu_custom_call.1} parent=1 // pred_check_branch
      %186 = sbr.rel (0) target = $region33
    $region32: #{tpu_custom_call.1} parent=1 // pred_region
      %s188 = ssub.s32 256, 256
      %189 = vsyncadd [#allocation9], %s188
      %s190 = sshll.u32 [#allocation10], 4
      %s191 = int_to_ptr.vmem [resolvable:$true] %s190
      %196 = dma.vmem_to_hbm [thread:$0]  %s191, 256, %s5, [#allocation9], 128, 128, 8
    $region33: #{tpu_custom_call.1} parent=1 // pred_fallthru
      _
    // Predicated region
    $region34: #{tpu_custom_call.1} parent=1 // pred_check
      _
    $region35: #{tpu_custom_call.1} parent=1 // pred_check_branch
      %198 = sbr.rel (0) target = $region37
    $region36: #{tpu_custom_call.1} parent=1 // pred_region
      %199 = dma.done [#allocation4], 256
    $region37: #{tpu_custom_call.1} parent=1 // pred_fallthru
      _
    // Predicated region
    $region38: #{tpu_custom_call.1} parent=1 // pred_check
      _
    $region39: #{tpu_custom_call.1} parent=1 // pred_check_branch
      %201 = sbr.rel (0) target = $region41
    $region40: #{tpu_custom_call.1} parent=1 // pred_region
      %202 = dma.done [#allocation9], 256
    $region41: #{tpu_custom_call.1} parent=1 // pred_fallthru
      _
    // Predicated region
    $region42: #{tpu_custom_call.1} parent=1 // pred_check
      _
    $region43: #{tpu_custom_call.1} parent=1 // pred_check_branch
      %204 = sbr.rel (0) target = $region45
    $region44: #{tpu_custom_call.1} parent=1 // pred_region
      %205 = dma.done [#allocation9], 256
    $region45: #{tpu_custom_call.1} parent=1 // pred_fallthru
      _
    %206 = vsyncpa [#allocation3], 1
    %207 = vsyncpa [#allocation6], 1
    %208 = vsyncpa [#allocation4], 1
    %209 = vsyncpa [#allocation9], 1

</llo_original>
